<compile_context>
chip_gen: v6e
topology: v6e:2x2x1
jax: 0.10.0
libtpu: 0.0.40
codegen_flags: <defaults>
</compile_context>

<pallas_src>
import jax
import jax.numpy as jnp
from jax import lax
from jax.experimental import pallas as pl
from jax.experimental.pallas import tpu as pltpu

# ----- hyper-parameters from CrossCLR_noq.__init__ --------------------------
TEMPERATURE = 0.03
TEMP_W = 0.0035
NEGATIVE_W = 0.8
SCORE_THRESHOLD = 0.7
# nn.Parameter logit_scale exists in the module but is unused in forward().


def _crossclr_rowtile_kernel(vn_ref, tn_ref, normv_ref, normt_ref,
                             wev_ref, wet_ref, out_v_ref, out_t_ref):
    """One row tile of both CrossCLR branches.

    vn_ref, tn_ref : (B, E)  bf16 L2-normalized embeddings (column side,
                     resident in VMEM across all grid steps).
    normv/t_ref    : (1, B)  f32, avg_sim / max(avg_sim) per column.
    wev/t_ref      : (TM, 1) f32, max-shifted exp(w / temp_w) for this tile.
    out_v/t_ref    : (TM, 1) f32, weighted per-row losses of the two branches.
    """
    tm = out_v_ref.shape[0]
    b = vn_ref.shape[0]
    r0 = pl.multiple_of(pl.program_id(0) * tm, tm)

    vn = vn_ref[...]                        # (B, E) bf16
    tn = tn_ref[...]
    vn_rows = vn_ref[pl.ds(r0, tm), :]      # (TM, E) bf16
    tn_rows = tn_ref[pl.ds(r0, tm), :]

    inv_temp = 1.0 / TEMPERATURE

    # (TM, E) x (B, E)^T -> (TM, B): bf16 operands on the MXU, f32 accumulate.
    def rows_x_allt(rows, all_feats):
        return lax.dot_general(rows, all_feats, (((1,), (1,)), ((), ())),
                               preferred_element_type=jnp.float32) * inv_temp

    cross_v = rows_x_allt(vn_rows, tn)      # logits_per_image rows
    clstr_v = rows_x_allt(vn_rows, vn)      # logits_clstr_vid rows
    cross_t = rows_x_allt(tn_rows, vn)      # logits_per_text rows
    clstr_t = rows_x_allt(tn_rows, tn)      # logits_clstr_txt rows

    # Shared (TM, B) masks -- built once (JAX does not CSE broadcasts).
    row_g = lax.broadcasted_iota(jnp.int32, (tm, b), 0) + r0
    col_g = lax.broadcasted_iota(jnp.int32, (tm, b), 1)
    eye = row_g == col_g
    off_diag = jnp.where(eye, 0.0, 1.0)

    neg_sel_v = jnp.broadcast_to(normv_ref[...] < SCORE_THRESHOLD, (tm, b))
    pos_sel_v = jnp.broadcast_to(normv_ref[...] > SCORE_THRESHOLD, (tm, b))
    neg_sel_t = jnp.broadcast_to(normt_ref[...] < SCORE_THRESHOLD, (tm, b))
    pos_sel_t = jnp.broadcast_to(normt_ref[...] > SCORE_THRESHOLD, (tm, b))

    neg_inf = jnp.float32(-jnp.inf)

    def branch(cross, clstr, neg_sel, pos_sel):
        # Columns with norm > thr are pruned (zeroed) in the cross logits,
        # except the diagonal which is always kept (matches the reference).
        prune_mask = jnp.where(eye, 1.0, jnp.where(pos_sel, 0.0, 1.0))
        pruned = cross * prune_mask                                    # (TM, B)
        # Extra in-modality negatives: columns with norm < thr of the
        # diag-zeroed cluster logits, scaled by negative_w.  Excluded columns
        # become -inf so exp() yields exact zeros (no overflow / wasted EUP).
        negs = jnp.where(neg_sel, NEGATIVE_W * (clstr * off_diag), neg_inf)
        m = jnp.maximum(jnp.max(pruned, axis=1, keepdims=True),
                        jnp.max(negs, axis=1, keepdims=True))          # finite
        denom = (jnp.sum(jnp.exp(pruned - m), axis=1, keepdims=True) +
                 jnp.sum(jnp.exp(negs - m), axis=1, keepdims=True))
        diag = jnp.sum(jnp.where(eye, cross, 0.0), axis=1, keepdims=True)
        # -log softmax(cat([pruned, negatives]), dim=1)[diagonal]
        return -(diag - m - jnp.log(denom))                            # (TM, 1)

    out_v_ref[...] = branch(cross_v, clstr_v, neg_sel_v, pos_sel_v) * wev_ref[...]
    out_t_ref[...] = branch(cross_t, clstr_t, neg_sel_t, pos_sel_t) * wet_ref[...]


def _pick_row_tile(batch):
    # Largest multiple-of-8 divisor of `batch`, capped at 256 (VMEM-friendly
    # and (8,128)-tiling compliant).  Fall back to the full batch (block ==
    # full array dim is always legal).
    for t in range(256, 7, -8):
        if t <= batch and batch % t == 0:
            return t
    return batch


def _vmem_limit_bytes(batch, embed, tm):
    # Resident bf16 column-side embeddings (+ stat vectors), double-buffered,
    # plus a generous budget of f32 (TM, B) slabs live per grid step.
    resident = 2 * 2 * (batch * embed * 2) + 4 * 2 * (batch * 4)
    per_step = 14 * tm * batch * 4
    est = resident + 2 * per_step + (1 << 20)
    return int(min(max(2 * est, 32 * 1024 * 1024), 100 * 1024 * 1024))


@jax.jit
def crossclr_noq_loss(video_features, text_features, input_vid, input_txt):
    batch, embed = video_features.shape

    # ---- O(B*D) prep (<1% of the O(B^2*E) kernel work), fused under jit ----
    def l2norm_bf16(x):                      # F.normalize(x, dim=1), eps=1e-12
        xf = x.astype(jnp.float32)
        ss = jnp.sum(xf * xf, axis=1, keepdims=True)
        return (xf * lax.rsqrt(jnp.maximum(ss, 1e-24))).astype(jnp.bfloat16)

    vn = l2norm_bf16(video_features)
    tn = l2norm_bf16(text_features)

    def avg_sim(raw):
        # mean_j of (raw @ raw.T * (1 - eye)) without the B x B gram matrix:
        #   avg_i = (raw_i . sum_j raw_j - |raw_i|^2) / B        (exact)
        rf = raw.astype(jnp.float32)
        s = jnp.sum(rf, axis=0)
        return (rf @ s - jnp.sum(rf * rf, axis=1)) / batch             # (B,)

    def col_norm_and_weights(avg):
        norm = (avg / jnp.max(avg)).reshape(1, batch)   # threshold statistic
        w = avg / jnp.sum(avg)
        # Max-shifted exp: the common factor cancels in sum(l*we)/sum(we),
        # removing the f32 overflow of exp(w / 0.0035) in the reference.
        wexp = jnp.exp((w - jnp.max(w)) / TEMP_W).reshape(batch, 1)
        return norm, wexp

    norm_v, wexp_v = col_norm_and_weights(avg_sim(input_vid))
    norm_t, wexp_t = col_norm_and_weights(avg_sim(input_txt))

    tm = _pick_row_tile(batch)
    grid = (batch // tm,)

    # TODO(synk): for extreme batch sizes where the B x E bf16 column-side
    # features no longer fit v7x VMEM, add a second (column) grid axis with a
    # flash-attention style online-softmax accumulator.
    wl_v, wl_t = pl.pallas_call(
        _crossclr_rowtile_kernel,
        out_shape=(jax.ShapeDtypeStruct((batch, 1), jnp.float32),
                   jax.ShapeDtypeStruct((batch, 1), jnp.float32)),
        grid_spec=pltpu.PrefetchScalarGridSpec(
            num_scalar_prefetch=0,
            grid=grid,
            in_specs=[
                pl.BlockSpec((batch, embed), lambda i: (0, 0)),   # vn (resident)
                pl.BlockSpec((batch, embed), lambda i: (0, 0)),   # tn (resident)
                pl.BlockSpec((1, batch), lambda i: (0, 0)),       # norm_v
                pl.BlockSpec((1, batch), lambda i: (0, 0)),       # norm_t
                pl.BlockSpec((tm, 1), lambda i: (i, 0)),          # wexp_v rows
                pl.BlockSpec((tm, 1), lambda i: (i, 0)),          # wexp_t rows
            ],
            out_specs=[
                pl.BlockSpec((tm, 1), lambda i: (i, 0)),
                pl.BlockSpec((tm, 1), lambda i: (i, 0)),
            ],
        ),
        compiler_params=pltpu.CompilerParams(
            dimension_semantics=("parallel",),
            vmem_limit_bytes=_vmem_limit_bytes(batch, embed, tm),
        ),
    )(vn, tn, norm_v, norm_t, wexp_v, wexp_t)

    # Final O(B) weighted means (the max-shift in wexp cancels in the ratio).
    loss_i = jnp.sum(wl_v) / jnp.sum(wexp_v)
    loss_t = jnp.sum(wl_t) / jnp.sum(wexp_t)
    return (loss_i + loss_t) * 0.5


if __name__ == "__main__":
    B, E, DIN = 8, 32, 32
    key = jax.random.PRNGKey(0)
    k1, k2, k3, k4 = jax.random.split(key, 4)
    video_features = jax.random.normal(k1, (B, E), dtype=jnp.float32)
    text_features = jax.random.normal(k2, (B, E), dtype=jnp.float32)
    # raw inputs: non-negative so the avg similarities behave like typical
    # feature similarities (any values work; the loss is well defined).
    input_vid = jax.random.uniform(k3, (B, DIN), dtype=jnp.float32)
    input_txt = jax.random.uniform(k4, (B, DIN), dtype=jnp.float32)

    loss = crossclr_noq_loss(video_features, text_features, input_vid, input_txt)
    jax.block_until_ready(loss)
    assert jnp.isfinite(loss), f"non-finite loss: {loss}"
    print("KERNEL_OK")
</pallas_src>

<mosaic_0001>
module attributes {stable_mosaic.version = 11 : i64} {
  func.func @_crossclr_rowtile_kernel(%arg0: i32, %arg1: memref<8x32xbf16, #tpu.memory_space<vmem>>, %arg2: memref<8x32xbf16, #tpu.memory_space<vmem>>, %arg3: memref<1x8xf32, #tpu.memory_space<vmem>>, %arg4: memref<1x8xf32, #tpu.memory_space<vmem>>, %arg5: memref<8x1xf32, #tpu.memory_space<vmem>>, %arg6: memref<8x1xf32, #tpu.memory_space<vmem>>, %arg7: memref<8x1xf32, #tpu.memory_space<vmem>>, %arg8: memref<8x1xf32, #tpu.memory_space<vmem>>) attributes {dimension_semantics = [#tpu.dimension_semantics<parallel>], iteration_bounds = array<i64: 1>, scalar_prefetch = 0 : i64, scratch_operands = 0 : i64, tpu.core_type = #tpu.core_type<tc>, window_params = [{pipeline_mode = #tpu.pipeline_mode<synchronous>, transform_indices = @transform_0, window_bounds = array<i64: 8, 32>}, {pipeline_mode = #tpu.pipeline_mode<synchronous>, transform_indices = @transform_1, window_bounds = array<i64: 8, 32>}, {pipeline_mode = #tpu.pipeline_mode<synchronous>, transform_indices = @transform_2, window_bounds = array<i64: 1, 8>}, {pipeline_mode = #tpu.pipeline_mode<synchronous>, transform_indices = @transform_3, window_bounds = array<i64: 1, 8>}, {transform_indices = @transform_4, window_bounds = array<i64: 8, 1>}, {transform_indices = @transform_5, window_bounds = array<i64: 8, 1>}, {transform_indices = @transform_6, window_bounds = array<i64: 8, 1>}, {transform_indices = @transform_7, window_bounds = array<i64: 8, 1>}]} {
    %c8_i32 = arith.constant 8 : i32
    %0 = arith.muli %arg0, %c8_i32 : i32
    %1 = tpu.assume_multiple %0, 8 : i32
    %c0 = arith.constant 0 : index
    %c0_0 = arith.constant 0 : index
    %2 = vector.load %arg1[%c0, %c0_0] : memref<8x32xbf16, #tpu.memory_space<vmem>>, vector<8x32xbf16>
    %c0_1 = arith.constant 0 : index
    %c0_2 = arith.constant 0 : index
    %3 = vector.load %arg2[%c0_1, %c0_2] : memref<8x32xbf16, #tpu.memory_space<vmem>>, vector<8x32xbf16>
    %4 = arith.index_cast %1 : i32 to index
    %c0_3 = arith.constant 0 : index
    %5 = vector.load %arg1[%4, %c0_3] : memref<8x32xbf16, #tpu.memory_space<vmem>>, vector<8x32xbf16>
    %6 = arith.index_cast %1 : i32 to index
    %c0_4 = arith.constant 0 : index
    %7 = vector.load %arg2[%6, %c0_4] : memref<8x32xbf16, #tpu.memory_space<vmem>>, vector<8x32xbf16>
    %cst = arith.constant dense<0.000000e+00> : vector<8x8xf32>
    %8 = tpu.matmul %5, %3, %cst {dimension_numbers = #tpu.dot_dimension_numbers<[1], [1], [0], [0], [0, 0, 1, 0], [], []>} : vector<8x32xbf16>, vector<8x32xbf16>, vector<8x8xf32> -> vector<8x8xf32>
    %cst_5 = arith.constant 33.3333321 : f32
    %9 = vector.broadcast %cst_5 : f32 to vector<8x8xf32>
    %10 = arith.mulf %8, %9 : vector<8x8xf32>
    %cst_6 = arith.constant dense<0.000000e+00> : vector<8x8xf32>
    %11 = tpu.matmul %5, %2, %cst_6 {dimension_numbers = #tpu.dot_dimension_numbers<[1], [1], [0], [0], [0, 0, 1, 0], [], []>} : vector<8x32xbf16>, vector<8x32xbf16>, vector<8x8xf32> -> vector<8x8xf32>
    %cst_7 = arith.constant 33.3333321 : f32
    %12 = vector.broadcast %cst_7 : f32 to vector<8x8xf32>
    %13 = arith.mulf %11, %12 : vector<8x8xf32>
    %cst_8 = arith.constant dense<0.000000e+00> : vector<8x8xf32>
    %14 = tpu.matmul %7, %2, %cst_8 {dimension_numbers = #tpu.dot_dimension_numbers<[1], [1], [0], [0], [0, 0, 1, 0], [], []>} : vector<8x32xbf16>, vector<8x32xbf16>, vector<8x8xf32> -> vector<8x8xf32>
    %cst_9 = arith.constant 33.3333321 : f32
    %15 = vector.broadcast %cst_9 : f32 to vector<8x8xf32>
    %16 = arith.mulf %14, %15 : vector<8x8xf32>
    %cst_10 = arith.constant dense<0.000000e+00> : vector<8x8xf32>
    %17 = tpu.matmul %7, %3, %cst_10 {dimension_numbers = #tpu.dot_dimension_numbers<[1], [1], [0], [0], [0, 0, 1, 0], [], []>} : vector<8x32xbf16>, vector<8x32xbf16>, vector<8x8xf32> -> vector<8x8xf32>
    %cst_11 = arith.constant 33.3333321 : f32
    %18 = vector.broadcast %cst_11 : f32 to vector<8x8xf32>
    %19 = arith.mulf %17, %18 : vector<8x8xf32>
    %20 = tpu.iota {dimensions = array<i32: 0>} : vector<8x8xi32>
    %21 = vector.broadcast %1 : i32 to vector<8x8xi32>
    %22 = arith.addi %20, %21 : vector<8x8xi32>
    %23 = tpu.iota {dimensions = array<i32: 1>} : vector<8x8xi32>
    %24 = arith.cmpi eq, %22, %23 : vector<8x8xi32>
    %cst_12 = arith.constant 0.000000e+00 : f32
    %cst_13 = arith.constant 1.000000e+00 : f32
    %25 = vector.broadcast %cst_12 : f32 to vector<8x8xf32>
    %26 = vector.broadcast %cst_13 : f32 to vector<8x8xf32>
    %27 = arith.select %24, %25, %26 : vector<8x8xi1>, vector<8x8xf32>
    %c0_14 = arith.constant 0 : index
    %c0_15 = arith.constant 0 : index
    %28 = vector.load %arg3[%c0_14, %c0_15] : memref<1x8xf32, #tpu.memory_space<vmem>>, vector<1x8xf32>
    %cst_16 = arith.constant 0.699999988 : f32
    %29 = vector.broadcast %cst_16 : f32 to vector<1x8xf32>
    %30 = arith.cmpf olt, %28, %29 : vector<1x8xf32>
    %31 = vector.shape_cast %30 : vector<1x8xi1> to vector<1x8xi1>
    %32 = vector.broadcast %31 : vector<1x8xi1> to vector<8x8xi1>
    %c0_17 = arith.constant 0 : index
    %c0_18 = arith.constant 0 : index
    %33 = vector.load %arg3[%c0_17, %c0_18] : memref<1x8xf32, #tpu.memory_space<vmem>>, vector<1x8xf32>
    %cst_19 = arith.constant 0.699999988 : f32
    %34 = vector.broadcast %cst_19 : f32 to vector<1x8xf32>
    %35 = arith.cmpf ogt, %33, %34 : vector<1x8xf32>
    %36 = vector.shape_cast %35 : vector<1x8xi1> to vector<1x8xi1>
    %37 = vector.broadcast %36 : vector<1x8xi1> to vector<8x8xi1>
    %c0_20 = arith.constant 0 : index
    %c0_21 = arith.constant 0 : index
    %38 = vector.load %arg4[%c0_20, %c0_21] : memref<1x8xf32, #tpu.memory_space<vmem>>, vector<1x8xf32>
    %cst_22 = arith.constant 0.699999988 : f32
    %39 = vector.broadcast %cst_22 : f32 to vector<1x8xf32>
    %40 = arith.cmpf olt, %38, %39 : vector<1x8xf32>
    %41 = vector.shape_cast %40 : vector<1x8xi1> to vector<1x8xi1>
    %42 = vector.broadcast %41 : vector<1x8xi1> to vector<8x8xi1>
    %c0_23 = arith.constant 0 : index
    %c0_24 = arith.constant 0 : index
    %43 = vector.load %arg4[%c0_23, %c0_24] : memref<1x8xf32, #tpu.memory_space<vmem>>, vector<1x8xf32>
    %cst_25 = arith.constant 0.699999988 : f32
    %44 = vector.broadcast %cst_25 : f32 to vector<1x8xf32>
    %45 = arith.cmpf ogt, %43, %44 : vector<1x8xf32>
    %46 = vector.shape_cast %45 : vector<1x8xi1> to vector<1x8xi1>
    %47 = vector.broadcast %46 : vector<1x8xi1> to vector<8x8xi1>
    %cst_26 = arith.constant 0.000000e+00 : f32
    %cst_27 = arith.constant 1.000000e+00 : f32
    %48 = vector.broadcast %cst_26 : f32 to vector<8x8xf32>
    %49 = vector.broadcast %cst_27 : f32 to vector<8x8xf32>
    %50 = arith.select %37, %48, %49 : vector<8x8xi1>, vector<8x8xf32>
    %cst_28 = arith.constant 1.000000e+00 : f32
    %51 = vector.broadcast %cst_28 : f32 to vector<8x8xf32>
    %52 = arith.select %24, %51, %50 : vector<8x8xi1>, vector<8x8xf32>
    %53 = arith.mulf %10, %52 : vector<8x8xf32>
    %54 = arith.mulf %13, %27 : vector<8x8xf32>
    %cst_29 = arith.constant 8.000000e-01 : f32
    %55 = vector.broadcast %cst_29 : f32 to vector<8x8xf32>
    %56 = arith.mulf %55, %54 : vector<8x8xf32>
    %cst_30 = arith.constant 0xFF800000 : f32
    %57 = vector.broadcast %cst_30 : f32 to vector<8x8xf32>
    %58 = arith.select %32, %56, %57 : vector<8x8xi1>, vector<8x8xf32>
    %cst_31 = arith.constant dense<0xFF800000> : vector<8xf32>
    %59 = vector.multi_reduction <maximumf>, %53, %cst_31 [1] : vector<8x8xf32> to vector<8xf32>
    %60 = vector.shape_cast %59 : vector<8xf32> to vector<8x1xf32>
    %cst_32 = arith.constant dense<0xFF800000> : vector<8xf32>
    %61 = vector.multi_reduction <maximumf>, %58, %cst_32 [1] : vector<8x8xf32> to vector<8xf32>
    %62 = vector.shape_cast %61 : vector<8xf32> to vector<8x1xf32>
    %63 = arith.maximumf %60, %62 : vector<8x1xf32>
    %64 = vector.broadcast %63 : vector<8x1xf32> to vector<8x8xf32>
    %65 = arith.subf %53, %64 : vector<8x8xf32>
    %66 = math.exp %65 : vector<8x8xf32>
    %cst_33 = arith.constant dense<0.000000e+00> : vector<8xf32>
    %67 = vector.multi_reduction <add>, %66, %cst_33 [1] : vector<8x8xf32> to vector<8xf32>
    %68 = vector.shape_cast %67 : vector<8xf32> to vector<8x1xf32>
    %69 = vector.broadcast %63 : vector<8x1xf32> to vector<8x8xf32>
    %70 = arith.subf %58, %69 : vector<8x8xf32>
    %71 = math.exp %70 : vector<8x8xf32>
    %cst_34 = arith.constant dense<0.000000e+00> : vector<8xf32>
    %72 = vector.multi_reduction <add>, %71, %cst_34 [1] : vector<8x8xf32> to vector<8xf32>
    %73 = vector.shape_cast %72 : vector<8xf32> to vector<8x1xf32>
    %74 = arith.addf %68, %73 : vector<8x1xf32>
    %cst_35 = arith.constant 0.000000e+00 : f32
    %75 = vector.broadcast %cst_35 : f32 to vector<8x8xf32>
    %76 = arith.select %24, %10, %75 : vector<8x8xi1>, vector<8x8xf32>
    %cst_36 = arith.constant dense<0.000000e+00> : vector<8xf32>
    %77 = vector.multi_reduction <add>, %76, %cst_36 [1] : vector<8x8xf32> to vector<8xf32>
    %78 = vector.shape_cast %77 : vector<8xf32> to vector<8x1xf32>
    %79 = arith.subf %78, %63 : vector<8x1xf32>
    %80 = math.log %74 : vector<8x1xf32>
    %81 = arith.subf %79, %80 : vector<8x1xf32>
    %cst_37 = arith.constant 0.000000e+00 : f32
    %82 = vector.broadcast %cst_37 : f32 to vector<8x1xf32>
    %83 = arith.subf %82, %81 : vector<8x1xf32>
    %c0_38 = arith.constant 0 : index
    %c0_39 = arith.constant 0 : index
    %84 = vector.load %arg5[%c0_38, %c0_39] : memref<8x1xf32, #tpu.memory_space<vmem>>, vector<8x1xf32>
    %85 = arith.mulf %83, %84 : vector<8x1xf32>
    %c0_40 = arith.constant 0 : index
    %c0_41 = arith.constant 0 : index
    %86 = vector.load %arg7[%c0_40, %c0_41] : memref<8x1xf32, #tpu.memory_space<vmem>>, vector<8x1xf32>
    tpu.vector_store %arg7[%c0_40, %c0_41], %85 {strides = array<i32>} : memref<8x1xf32, #tpu.memory_space<vmem>>, vector<8x1xf32>,
    %cst_42 = arith.constant 0.000000e+00 : f32
    %cst_43 = arith.constant 1.000000e+00 : f32
    %87 = vector.broadcast %cst_42 : f32 to vector<8x8xf32>
    %88 = vector.broadcast %cst_43 : f32 to vector<8x8xf32>
    %89 = arith.select %47, %87, %88 : vector<8x8xi1>, vector<8x8xf32>
    %cst_44 = arith.constant 1.000000e+00 : f32
    %90 = vector.broadcast %cst_44 : f32 to vector<8x8xf32>
    %91 = arith.select %24, %90, %89 : vector<8x8xi1>, vector<8x8xf32>
    %92 = arith.mulf %16, %91 : vector<8x8xf32>
    %93 = arith.mulf %19, %27 : vector<8x8xf32>
    %cst_45 = arith.constant 8.000000e-01 : f32
    %94 = vector.broadcast %cst_45 : f32 to vector<8x8xf32>
    %95 = arith.mulf %94, %93 : vector<8x8xf32>
    %cst_46 = arith.constant 0xFF800000 : f32
    %96 = vector.broadcast %cst_46 : f32 to vector<8x8xf32>
    %97 = arith.select %42, %95, %96 : vector<8x8xi1>, vector<8x8xf32>
    %cst_47 = arith.constant dense<0xFF800000> : vector<8xf32>
    %98 = vector.multi_reduction <maximumf>, %92, %cst_47 [1] : vector<8x8xf32> to vector<8xf32>
    %99 = vector.shape_cast %98 : vector<8xf32> to vector<8x1xf32>
    %cst_48 = arith.constant dense<0xFF800000> : vector<8xf32>
    %100 = vector.multi_reduction <maximumf>, %97, %cst_48 [1] : vector<8x8xf32> to vector<8xf32>
    %101 = vector.shape_cast %100 : vector<8xf32> to vector<8x1xf32>
    %102 = arith.maximumf %99, %101 : vector<8x1xf32>
    %103 = vector.broadcast %102 : vector<8x1xf32> to vector<8x8xf32>
    %104 = arith.subf %92, %103 : vector<8x8xf32>
    %105 = math.exp %104 : vector<8x8xf32>
    %cst_49 = arith.constant dense<0.000000e+00> : vector<8xf32>
    %106 = vector.multi_reduction <add>, %105, %cst_49 [1] : vector<8x8xf32> to vector<8xf32>
    %107 = vector.shape_cast %106 : vector<8xf32> to vector<8x1xf32>
    %108 = vector.broadcast %102 : vector<8x1xf32> to vector<8x8xf32>
    %109 = arith.subf %97, %108 : vector<8x8xf32>
    %110 = math.exp %109 : vector<8x8xf32>
    %cst_50 = arith.constant dense<0.000000e+00> : vector<8xf32>
    %111 = vector.multi_reduction <add>, %110, %cst_50 [1] : vector<8x8xf32> to vector<8xf32>
    %112 = vector.shape_cast %111 : vector<8xf32> to vector<8x1xf32>
    %113 = arith.addf %107, %112 : vector<8x1xf32>
    %cst_51 = arith.constant 0.000000e+00 : f32
    %114 = vector.broadcast %cst_51 : f32 to vector<8x8xf32>
    %115 = arith.select %24, %16, %114 : vector<8x8xi1>, vector<8x8xf32>
    %cst_52 = arith.constant dense<0.000000e+00> : vector<8xf32>
    %116 = vector.multi_reduction <add>, %115, %cst_52 [1] : vector<8x8xf32> to vector<8xf32>
    %117 = vector.shape_cast %116 : vector<8xf32> to vector<8x1xf32>
    %118 = arith.subf %117, %102 : vector<8x1xf32>
    %119 = math.log %113 : vector<8x1xf32>
    %120 = arith.subf %118, %119 : vector<8x1xf32>
    %cst_53 = arith.constant 0.000000e+00 : f32
    %121 = vector.broadcast %cst_53 : f32 to vector<8x1xf32>
    %122 = arith.subf %121, %120 : vector<8x1xf32>
    %c0_54 = arith.constant 0 : index
    %c0_55 = arith.constant 0 : index
    %123 = vector.load %arg6[%c0_54, %c0_55] : memref<8x1xf32, #tpu.memory_space<vmem>>, vector<8x1xf32>
    %124 = arith.mulf %122, %123 : vector<8x1xf32>
    %c0_56 = arith.constant 0 : index
    %c0_57 = arith.constant 0 : index
    %125 = vector.load %arg8[%c0_56, %c0_57] : memref<8x1xf32, #tpu.memory_space<vmem>>, vector<8x1xf32>
    tpu.vector_store %arg8[%c0_56, %c0_57], %124 {strides = array<i32>} : memref<8x1xf32, #tpu.memory_space<vmem>>, vector<8x1xf32>,
    return
  }
  func.func @transform_0(%arg0: i32) -> (i32, i32) {
    %c0_i32 = arith.constant 0 : i32
    %c0_i32_0 = arith.constant 0 : i32
    %c0_i32_1 = arith.constant 0 : i32
    return %c0_i32, %c0_i32_0 : i32, i32
  }
  func.func @transform_1(%arg0: i32) -> (i32, i32) {
    %c0_i32 = arith.constant 0 : i32
    %c0_i32_0 = arith.constant 0 : i32
    %c0_i32_1 = arith.constant 0 : i32
    return %c0_i32, %c0_i32_0 : i32, i32
  }
  func.func @transform_2(%arg0: i32) -> (i32, i32) {
    %c0_i32 = arith.constant 0 : i32
    %c0_i32_0 = arith.constant 0 : i32
    %c0_i32_1 = arith.constant 0 : i32
    return %c0_i32, %c0_i32_0 : i32, i32
  }
  func.func @transform_3(%arg0: i32) -> (i32, i32) {
    %c0_i32 = arith.constant 0 : i32
    %c0_i32_0 = arith.constant 0 : i32
    %c0_i32_1 = arith.constant 0 : i32
    return %c0_i32, %c0_i32_0 : i32, i32
  }
  func.func @transform_4(%arg0: i32) -> (i32, i32) {
    %c0_i32 = arith.constant 0 : i32
    %c0_i32_0 = arith.constant 0 : i32
    return %arg0, %c0_i32 : i32, i32
  }
  func.func @transform_5(%arg0: i32) -> (i32, i32) {
    %c0_i32 = arith.constant 0 : i32
    %c0_i32_0 = arith.constant 0 : i32
    return %arg0, %c0_i32 : i32, i32
  }
  func.func @transform_6(%arg0: i32) -> (i32, i32) {
    %c0_i32 = arith.constant 0 : i32
    %c0_i32_0 = arith.constant 0 : i32
    return %arg0, %c0_i32 : i32, i32
  }
  func.func @transform_7(%arg0: i32) -> (i32, i32) {
    %c0_i32 = arith.constant 0 : i32
    %c0_i32_0 = arith.constant 0 : i32
    return %arg0, %c0_i32 : i32, i32
  }
}

</mosaic_0001>

<llo_original>
// kernel: crossclr_noq_loss.1
$region0: #{crossclr_noq_loss.1}
  #allocation0 [shape = 'u32[]', space=smem, size = 0x4, offset = 0x4, fixed_abs, tag = 'smem constant byte address 0x4 - core index']
  #allocation1 [shape = 'u32[144,128]{1,0:T(1,128)}', space=vmem, size = 0x12000, scoped, tag = 'internal scratch']
  %s0 = inlined_call_operand.vmem [shape: bf16[8,32], index: 0, kind: input, shape index: {}]
  %s1 = inlined_call_operand.vmem [shape: bf16[8,32], index: 1, kind: input, shape index: {}]
  %s2 = inlined_call_operand.vmem [shape: f32[1,8], index: 2, kind: input, shape index: {}]
  %s3 = inlined_call_operand.vmem [shape: f32[1,8], index: 3, kind: input, shape index: {}]
  %s4 = inlined_call_operand.vmem [shape: f32[8,1], index: 4, kind: input, shape index: {}]
  %s5 = inlined_call_operand.vmem [shape: f32[8,1], index: 5, kind: input, shape index: {}]
  %s6 = inlined_call_operand.vmem [shape: f32[8,1], index: 6, kind: output, shape index: {0}]
  %s7 = inlined_call_operand.vmem [shape: f32[8,1], index: 7, kind: output, shape index: {1}]
  %8 = xla_tuple %s6, %s7
  %s9 = sld [smem:[#allocation0]]
  $region42: #{crossclr_noq_loss.1} parent=0
    _
  %s11 = ssub.s32 1, %s9
  %s12 = scalar_select 0, %s11, %s9
  // Predicated region
  $region2: #{crossclr_noq_loss.1} parent=0 // pred_check
    _
  $region3: #{crossclr_noq_loss.1} parent=0 // pred_check_branch
    %14 = sbr.rel (0) target = $region5
  $region4: #{crossclr_noq_loss.1} parent=0 // pred_region
    _
  $region5: #{crossclr_noq_loss.1} parent=0 // pred_fallthru
    _
  // Predicated region
  $region6: #{crossclr_noq_loss.1} parent=0 // pred_check
    _
  $region7: #{crossclr_noq_loss.1} parent=0 // pred_check_branch
    %16 = sbr.rel (0) target = $region9
  $region8: #{crossclr_noq_loss.1} parent=0 // pred_region
    _
  $region9: #{crossclr_noq_loss.1} parent=0 // pred_fallthru
    _
  // Predicated region
  $region10: #{crossclr_noq_loss.1} parent=0 // pred_check
    _
  $region11: #{crossclr_noq_loss.1} parent=0 // pred_check_branch
    %18 = sbr.rel (0) target = $region13
  $region12: #{crossclr_noq_loss.1} parent=0 // pred_region
    _
  $region13: #{crossclr_noq_loss.1} parent=0 // pred_fallthru
    _
  // Predicated region
  $region14: #{crossclr_noq_loss.1} parent=0 // pred_check
    _
  $region15: #{crossclr_noq_loss.1} parent=0 // pred_check_branch
    %20 = sbr.rel (0) target = $region17
  $region16: #{crossclr_noq_loss.1} parent=0 // pred_region
    _
  $region17: #{crossclr_noq_loss.1} parent=0 // pred_fallthru
    _
  // Predicated region
  $region18: #{crossclr_noq_loss.1} parent=0 // pred_check
    _
  $region19: #{crossclr_noq_loss.1} parent=0 // pred_check_branch
    %22 = sbr.rel (0) target = $region21
  $region20: #{crossclr_noq_loss.1} parent=0 // pred_region
    _
  $region21: #{crossclr_noq_loss.1} parent=0 // pred_fallthru
    _
  // Predicated region
  $region22: #{crossclr_noq_loss.1} parent=0 // pred_check
    _
  $region23: #{crossclr_noq_loss.1} parent=0 // pred_check_branch
    %24 = sbr.rel (0) target = $region25
  $region24: #{crossclr_noq_loss.1} parent=0 // pred_region
    _
  $region25: #{crossclr_noq_loss.1} parent=0 // pred_fallthru
    _
  %s26 = smul.u32 0, 8
  %v27 = vld [vmem:[%s0] sm:$0xf]
  %v28 = vld [vmem:[%s1] sm:$0xf]
  %s29 = sshra.s32 %s26, 3
  %s30 = sand.u32 %s26, 7
  %s31 = smul.addr %s29, 4
  %s32 = scalar_lea.vmem %s0, %s31
  %v33 = vld [vmem:[%s32] sm:$0xf]
  %s34 = smul.addr %s29, 4
  %s35 = scalar_lea.vmem %s1, %s34
  %v36 = vld [vmem:[%s35] sm:$0xf]
  %vm37 = vcmask 261120
  %v39 = vsel %vm37, %v33, 0
  %v42 = vsel %vm37, %v28, 0
  %44 = vmatprep.subr.bf16.mxu0 0
  %45 = vmatpush1.bf16.xpose.msra.mxu0 0
  %46 = vmatprep.subr.bf16.mxu0 0
  %47 = vmatpush1.bf16.xpose.msra.mxu0 0
  %48 = vmatprep.subr.bf16.mxu0 0
  %49 = vmatpush1.bf16.xpose.msra.mxu0 0
  %50 = vmatprep.subr.bf16.mxu0 0
  %51 = vmatpush1.bf16.xpose.msra.mxu0 0
  %52 = vmatprep.subr.bf16.mxu0 0
  %53 = vmatpush1.bf16.xpose.msra.mxu0 0
  %54 = vmatprep.subr.bf16.mxu0 0
  %55 = vmatpush1.bf16.xpose.msra.mxu0 0
  %56 = vmatprep.subr.bf16.mxu0 0
  %57 = vmatpush1.bf16.xpose.msra.mxu0 0
  %58 = vmatprep.subr.bf16.mxu0 0
  %59 = vmatpush1.bf16.xpose.msra.mxu0 %v42
  %60 = vmatprep.subr.bf16.mxu0 0
  %61 = vmatpush2.bf16.xpose.msra.mxu0 0
  %62 = vmatprep.subr.bf16.mxu0 0
  %63 = vmatpush2.bf16.xpose.msra.mxu0 0
  %64 = vmatprep.subr.bf16.mxu0 0
  %65 = vmatpush2.bf16.xpose.msra.mxu0 0
  %66 = vmatprep.subr.bf16.mxu0 0
  %67 = vmatpush2.bf16.xpose.msra.mxu0 0
  %68 = vmatprep.subr.bf16.mxu0 0
  %69 = vmatpush2.bf16.xpose.msra.mxu0 0
  %70 = vmatprep.subr.bf16.mxu0 0
  %71 = vmatpush2.bf16.xpose.msra.mxu0 0
  %72 = vmatprep.subr.bf16.mxu0 0
  %73 = vmatpush2.bf16.xpose.msra.mxu0 0
  %74 = vmatprep.subr.bf16.mxu0 0
  %75 = vmatpush2.bf16.xpose.msra.mxu0 0
  %76 = vmatprep.mubr.bf16.mxu0 0
  %77 = vmatmul.mubr.bf16.gmra.mxu0 %v39
  %v78 = vpop.f32.mrf.mxu0
  %v79 = vadd.f32 0.0, %v78
  %v80 = vpop.f32.mrf.mxu0
  %v81 = vpop.f32.mrf.mxu0
  %v82 = vpop.f32.mrf.mxu0
  %83 = vdwg.mxu0
  %v84 = vmul.f32 %v79, 33.333332
  %v86 = vsel %vm37, %v27, 0
  %88 = vmatprep.subr.bf16.mxu0 0
  %89 = vmatpush1.bf16.xpose.msra.mxu0 0
  %90 = vmatprep.subr.bf16.mxu0 0
  %91 = vmatpush1.bf16.xpose.msra.mxu0 0
  %92 = vmatprep.subr.bf16.mxu0 0
  %93 = vmatpush1.bf16.xpose.msra.mxu0 0
  %94 = vmatprep.subr.bf16.mxu0 0
  %95 = vmatpush1.bf16.xpose.msra.mxu0 0
  %96 = vmatprep.subr.bf16.mxu0 0
  %97 = vmatpush1.bf16.xpose.msra.mxu0 0
  %98 = vmatprep.subr.bf16.mxu0 0
  %99 = vmatpush1.bf16.xpose.msra.mxu0 0
  %100 = vmatprep.subr.bf16.mxu0 0
  %101 = vmatpush1.bf16.xpose.msra.mxu0 0
  %102 = vmatprep.subr.bf16.mxu0 0
  %103 = vmatpush1.bf16.xpose.msra.mxu0 %v86
  %104 = vmatprep.subr.bf16.mxu0 0
  %105 = vmatpush2.bf16.xpose.msra.mxu0 0
  %106 = vmatprep.subr.bf16.mxu0 0
  %107 = vmatpush2.bf16.xpose.msra.mxu0 0
  %108 = vmatprep.subr.bf16.mxu0 0
  %109 = vmatpush2.bf16.xpose.msra.mxu0 0
  %110 = vmatprep.subr.bf16.mxu0 0
  %111 = vmatpush2.bf16.xpose.msra.mxu0 0
  %112 = vmatprep.subr.bf16.mxu0 0
  %113 = vmatpush2.bf16.xpose.msra.mxu0 0
  %114 = vmatprep.subr.bf16.mxu0 0
  %115 = vmatpush2.bf16.xpose.msra.mxu0 0
  %116 = vmatprep.subr.bf16.mxu0 0
  %117 = vmatpush2.bf16.xpose.msra.mxu0 0
  %118 = vmatprep.subr.bf16.mxu0 0
  %119 = vmatpush2.bf16.xpose.msra.mxu0 0
  %120 = vmatprep.mubr.bf16.mxu0 0
  %121 = vmatmul.mubr.bf16.gmra.mxu0 %v39
  %v122 = vpop.f32.mrf.mxu0
  %v123 = vadd.f32 0.0, %v122
  %v124 = vpop.f32.mrf.mxu0
  %v125 = vpop.f32.mrf.mxu0
  %v126 = vpop.f32.mrf.mxu0
  %127 = vdwg.mxu0
  %v128 = vmul.f32 %v123, 33.333332
  %v130 = vsel %vm37, %v36, 0
  %132 = vmatprep.subr.bf16.mxu0 0
  %133 = vmatpush1.bf16.xpose.msra.mxu0 0
  %134 = vmatprep.subr.bf16.mxu0 0
  %135 = vmatpush1.bf16.xpose.msra.mxu0 0
  %136 = vmatprep.subr.bf16.mxu0 0
  %137 = vmatpush1.bf16.xpose.msra.mxu0 0
  %138 = vmatprep.subr.bf16.mxu0 0
  %139 = vmatpush1.bf16.xpose.msra.mxu0 0
  %140 = vmatprep.subr.bf16.mxu0 0
  %141 = vmatpush1.bf16.xpose.msra.mxu0 0
  %142 = vmatprep.subr.bf16.mxu0 0
  %143 = vmatpush1.bf16.xpose.msra.mxu0 0
  %144 = vmatprep.subr.bf16.mxu0 0
  %145 = vmatpush1.bf16.xpose.msra.mxu0 0
  %146 = vmatprep.subr.bf16.mxu0 0
  %147 = vmatpush1.bf16.xpose.msra.mxu0 %v86
  %148 = vmatprep.subr.bf16.mxu0 0
  %149 = vmatpush2.bf16.xpose.msra.mxu0 0
  %150 = vmatprep.subr.bf16.mxu0 0
  %151 = vmatpush2.bf16.xpose.msra.mxu0 0
  %152 = vmatprep.subr.bf16.mxu0 0
  %153 = vmatpush2.bf16.xpose.msra.mxu0 0
  %154 = vmatprep.subr.bf16.mxu0 0
  %155 = vmatpush2.bf16.xpose.msra.mxu0 0
  %156 = vmatprep.subr.bf16.mxu0 0
  %157 = vmatpush2.bf16.xpose.msra.mxu0 0
  %158 = vmatprep.subr.bf16.mxu0 0
  %159 = vmatpush2.bf16.xpose.msra.mxu0 0
  %160 = vmatprep.subr.bf16.mxu0 0
  %161 = vmatpush2.bf16.xpose.msra.mxu0 0
  %162 = vmatprep.subr.bf16.mxu0 0
  %163 = vmatpush2.bf16.xpose.msra.mxu0 0
  %164 = vmatprep.mubr.bf16.mxu0 0
  %165 = vmatmul.mubr.bf16.gmra.mxu0 %v130
  %v166 = vpop.f32.mrf.mxu0
  %v167 = vadd.f32 0.0, %v166
  %v168 = vpop.f32.mrf.mxu0
  %v169 = vpop.f32.mrf.mxu0
  %v170 = vpop.f32.mrf.mxu0
  %171 = vdwg.mxu0
  %v172 = vmul.f32 %v167, 33.333332
  %173 = vmatprep.subr.bf16.mxu0 0
  %174 = vmatpush1.bf16.xpose.msra.mxu0 0
  %175 = vmatprep.subr.bf16.mxu0 0
  %176 = vmatpush1.bf16.xpose.msra.mxu0 0
  %177 = vmatprep.subr.bf16.mxu0 0
  %178 = vmatpush1.bf16.xpose.msra.mxu0 0
  %179 = vmatprep.subr.bf16.mxu0 0
  %180 = vmatpush1.bf16.xpose.msra.mxu0 0
  %181 = vmatprep.subr.bf16.mxu0 0
  %182 = vmatpush1.bf16.xpose.msra.mxu0 0
  %183 = vmatprep.subr.bf16.mxu0 0
  %184 = vmatpush1.bf16.xpose.msra.mxu0 0
  %185 = vmatprep.subr.bf16.mxu0 0
  %186 = vmatpush1.bf16.xpose.msra.mxu0 0
  %187 = vmatprep.subr.bf16.mxu0 0
  %188 = vmatpush1.bf16.xpose.msra.mxu0 %v42
  %189 = vmatprep.subr.bf16.mxu0 0
  %190 = vmatpush2.bf16.xpose.msra.mxu0 0
  %191 = vmatprep.subr.bf16.mxu0 0
  %192 = vmatpush2.bf16.xpose.msra.mxu0 0
  %193 = vmatprep.subr.bf16.mxu0 0
  %194 = vmatpush2.bf16.xpose.msra.mxu0 0
  %195 = vmatprep.subr.bf16.mxu0 0
  %196 = vmatpush2.bf16.xpose.msra.mxu0 0
  %197 = vmatprep.subr.bf16.mxu0 0
  %198 = vmatpush2.bf16.xpose.msra.mxu0 0
  %199 = vmatprep.subr.bf16.mxu0 0
  %200 = vmatpush2.bf16.xpose.msra.mxu0 0
  %201 = vmatprep.subr.bf16.mxu0 0
  %202 = vmatpush2.bf16.xpose.msra.mxu0 0
  %203 = vmatprep.subr.bf16.mxu0 0
  %204 = vmatpush2.bf16.xpose.msra.mxu0 0
  %205 = vmatprep.mubr.bf16.mxu0 0
  %206 = vmatmul.mubr.bf16.gmra.mxu0 %v130
  %v207 = vpop.f32.mrf.mxu0
  %v208 = vadd.f32 0.0, %v207
  %v209 = vpop.f32.mrf.mxu0
  %v210 = vpop.f32.mrf.mxu0
  %v211 = vpop.f32.mrf.mxu0
  %212 = vdwg.mxu0
  %v213 = vmul.f32 %v208, 33.333332
  %v214 = vlaneseq
  %v215 = vshrl.u32 %v214, 7
  %v216 = vstv %s26
  %v217 = vadd.s32 %v215, %v216
  %v218 = vlaneseq
  %v219 = vand.u32 %v218, 127
  %vm220 = vcmp.eq.s32.totalorder %v217, %v219
  %v221 = vsel %vm220, 0.0, 1.0
  %v222 = vld [vmem:[%s2] sm:$0x1]
  %vm223 = vcmp.lt.f32.partialorder %v222, 0.7
  %v224 = vsel %vm223, 1, 0
  %v225 = vlaneseq
  %v226 = vshrl.u32 %v225, 7
  %v227 = vsub.s32 0, %v226
  %v228 = vrot.slane %v224, %v227
  %vm229 = vcmp.eq.s32.totalorder %v228, 1
  %vm230 = vcmp.gt.f32.partialorder %v222, 0.7
  %v231 = vsel %vm230, 1, 0
  %v232 = vlaneseq
  %v233 = vshrl.u32 %v232, 7
  %v234 = vsub.s32 0, %v233
  %v235 = vrot.slane %v231, %v234
  %vm236 = vcmp.eq.s32.totalorder %v235, 1
  %v237 = vld [vmem:[%s3] sm:$0x1]
  %vm238 = vcmp.lt.f32.partialorder %v237, 0.7
  %v239 = vsel %vm238, 1, 0
  %v240 = vlaneseq
  %v241 = vshrl.u32 %v240, 7
  %v242 = vsub.s32 0, %v241
  %v243 = vrot.slane %v239, %v242
  %vm244 = vcmp.eq.s32.totalorder %v243, 1
  %vm245 = vcmp.gt.f32.partialorder %v237, 0.7
  %v246 = vsel %vm245, 1, 0
  %v247 = vlaneseq
  %v248 = vshrl.u32 %v247, 7
  %v249 = vsub.s32 0, %v248
  %v250 = vrot.slane %v246, %v249
  %vm251 = vcmp.eq.s32.totalorder %v250, 1
  %v252 = vsel %vm236, 0.0, 1.0
  %v253 = vsel %vm220, 1.0, %v252
  %v254 = vmul.f32 %v84, %v253
  %v255 = vmul.f32 %v128, %v221
  %v256 = vmul.f32 %v255, 0.8
  %v257 = vsel %vm229, %v256, -inf
  %vm258 = vcmask 64512
  %v259 = vsel %vm258, %v254, -inf
  %260 = vmax.xlane.f32.xlu0 %v259
  %v261 = vpop.xlane.xlu0 %260
  %v262 = vsel %vm258, %v257, -inf
  %263 = vmax.xlane.f32.xlu0 %v262
  %v264 = vpop.xlane.xlu0 %263
  %v265 = vmax.f32 %v261, %v264
  %v266 = vsub.f32 %v254, %v265
  %v267 = vmul.f32 %v266, 1.442695
  %v268 = vpow.pop %v267
  %v269 = vsel %vm258, %v268, 0.0
  %270 = vadd.xlane.f32.xlu0 %v269
  %v271 = vpop.xlane.xlu0 %270
  %v272 = vsub.f32 %v257, %v265
  %v273 = vmul.f32 %v272, 1.442695
  %v274 = vpow.pop %v273
  %v275 = vsel %vm258, %v274, 0.0
  %276 = vadd.xlane.f32.xlu0 %v275
  %v277 = vpop.xlane.xlu0 %276
  %v278 = vadd.f32 %v271, %v277
  %v279 = vsel %vm220, %v84, 0.0
  %v280 = vsel %vm258, %v279, 0.0
  %281 = vadd.xlane.f32.xlu0 %v280
  %v282 = vpop.xlane.xlu0 %281
  %v283 = vsub.f32 %v282, %v265
  %v284 = vlog2.pop %v278
  %v285 = vmul.f32 %v284, 0.6931472
  %v286 = vsub.f32 %v283, %v285
  %v287 = vsub.f32 0.0, %v286
  %v288 = vld [vmem:[%s4] sm:$0xff]
  %v289 = vmul.f32 %v287, %v288
  %vm290 = vcmask 7168
  %291 = vst.msk [vmem:[%s6] sm:$0xff] %vm290, %v289
  %v292 = vsel %vm251, 0.0, 1.0
  %v293 = vsel %vm220, 1.0, %v292
  %v294 = vmul.f32 %v172, %v293
  %v295 = vmul.f32 %v213, %v221
  %v296 = vmul.f32 %v295, 0.8
  %v297 = vsel %vm244, %v296, -inf
  %v298 = vsel %vm258, %v294, -inf
  %299 = vmax.xlane.f32.xlu0 %v298
  %v300 = vpop.xlane.xlu0 %299
  %v301 = vsel %vm258, %v297, -inf
  %302 = vmax.xlane.f32.xlu0 %v301
  %v303 = vpop.xlane.xlu0 %302
  %v304 = vmax.f32 %v300, %v303
  %v305 = vsub.f32 %v294, %v304
  %v306 = vmul.f32 %v305, 1.442695
  %v307 = vpow.pop %v306
  %v308 = vsel %vm258, %v307, 0.0
  %309 = vadd.xlane.f32.xlu0 %v308
  %v310 = vpop.xlane.xlu0 %309
  %v311 = vsub.f32 %v297, %v304
  %v312 = vmul.f32 %v311, 1.442695
  %v313 = vpow.pop %v312
  %v314 = vsel %vm258, %v313, 0.0
  %315 = vadd.xlane.f32.xlu0 %v314
  %v316 = vpop.xlane.xlu0 %315
  %v317 = vadd.f32 %v310, %v316
  %v318 = vsel %vm220, %v172, 0.0
  %v319 = vsel %vm258, %v318, 0.0
  %320 = vadd.xlane.f32.xlu0 %v319
  %v321 = vpop.xlane.xlu0 %320
  %v322 = vsub.f32 %v321, %v304
  %v323 = vlog2.pop %v317
  %v324 = vmul.f32 %v323, 0.6931472
  %v325 = vsub.f32 %v322, %v324
  %v326 = vsub.f32 0.0, %v325
  %v327 = vld [vmem:[%s5] sm:$0xff]
  %v328 = vmul.f32 %v326, %v327
  %329 = vst.msk [vmem:[%s7] sm:$0xff] %vm290, %v328
  // Predicated region
  $region26: #{crossclr_noq_loss.1} parent=0 // pred_check
    _
  $region27: #{crossclr_noq_loss.1} parent=0 // pred_check_branch
    %331 = sbr.rel (0) target = $region29
  $region28: #{crossclr_noq_loss.1} parent=0 // pred_region
    _
  $region29: #{crossclr_noq_loss.1} parent=0 // pred_fallthru
    _
  // Predicated region
  $region30: #{crossclr_noq_loss.1} parent=0 // pred_check
    _
  $region31: #{crossclr_noq_loss.1} parent=0 // pred_check_branch
    %333 = sbr.rel (0) target = $region33
  $region32: #{crossclr_noq_loss.1} parent=0 // pred_region
    _
  $region33: #{crossclr_noq_loss.1} parent=0 // pred_fallthru
    _
  // Predicated region
  $region34: #{crossclr_noq_loss.1} parent=0 // pred_check
    _
  $region35: #{crossclr_noq_loss.1} parent=0 // pred_check_branch
    %335 = sbr.rel (0) target = $region37
  $region36: #{crossclr_noq_loss.1} parent=0 // pred_region
    _
  $region37: #{crossclr_noq_loss.1} parent=0 // pred_fallthru
    _
  // Predicated region
  $region38: #{crossclr_noq_loss.1} parent=0 // pred_check
    _
  $region39: #{crossclr_noq_loss.1} parent=0 // pred_check_branch
    %337 = sbr.rel (0) target = $region41
  $region40: #{crossclr_noq_loss.1} parent=0 // pred_region
    _
  $region41: #{crossclr_noq_loss.1} parent=0 // pred_fallthru
    _

</llo_original>
